<compile_context>
chip_gen: v5e
topology: v5e:2x2
jax: 0.10.0
libtpu: 0.0.40
codegen_flags: <defaults>
</compile_context>

<pallas_src>
import functools

import jax
import jax.numpy as jnp
from jax.experimental import pallas as pl
from jax.experimental.pallas import tpu as pltpu

HIDDEN = 64


def _rup(n, m):
    return ((n + m - 1) // m) * m


# ---------------------------------------------------------------------------
# Parameter packing: one (rows, HIDDEN) f32 buffer, rows 8-aligned per layer.
#   [ W1 (in,64) ; b1 (1,64) ; pad | W2 (64,64) ; b2 (1,64) ; pad |
#     W3 (64,64 zero-padded cols) ; b3 (1,64 zero-padded) ; pad ]
# ---------------------------------------------------------------------------
def pack_params(params):
    input_dim = params["w1"].shape[0]
    n_actions = params["w3"].shape[1]
    H = HIDDEN

    off_w1 = 0
    off_b1 = input_dim
    blk1 = _rup(input_dim + 1, 8)
    off_w2 = blk1
    off_b2 = blk1 + H
    blk2 = _rup(H + 1, 8)
    off_w3 = blk1 + blk2
    off_b3 = off_w3 + H
    total = _rup(off_b3 + 1, 8)

    buf = jnp.zeros((total, H), jnp.float32)
    buf = buf.at[off_w1:off_w1 + input_dim, :].set(params["w1"])
    buf = buf.at[off_b1, :].set(params["b1"].reshape(H))
    buf = buf.at[off_w2:off_w2 + H, :].set(params["w2"])
    buf = buf.at[off_b2, :].set(params["b2"].reshape(H))
    buf = buf.at[off_w3:off_w3 + H, :n_actions].set(params["w3"])
    buf = buf.at[off_b3, :n_actions].set(params["b3"].reshape(n_actions))

    offs = (off_w1, off_b1, off_w2, off_b2, off_w3, off_b3)
    return buf, offs, input_dim, n_actions


# ---------------------------------------------------------------------------
# Fused MLP kernel: one batch tile (TM, input_dim) per grid step; params are
# fully VMEM-resident (same block every step -> single DMA).
# ---------------------------------------------------------------------------
def _make_mlp_kernel(input_dim, n_actions, offs):
    o_w1, o_b1, o_w2, o_b2, o_w3, o_b3 = offs
    H = HIDDEN

    def kernel(x_ref, p_ref, o_ref):
        x = x_ref[...]
        # Static slices of the packed params ref (zero-cost views).
        w1 = p_ref[o_w1:o_w1 + input_dim, :]
        b1 = p_ref[o_b1:o_b1 + 1, :]
        w2 = p_ref[o_w2:o_w2 + H, :]
        b2 = p_ref[o_b2:o_b2 + 1, :]
        w3 = p_ref[o_w3:o_w3 + H, :]      # (H, H), cols >= n_actions are zero
        b3 = p_ref[o_b3:o_b3 + 1, :]

        h1 = jnp.maximum(
            jnp.dot(x, w1, preferred_element_type=jnp.float32) + b1, 0.0)
        h2 = jnp.maximum(
            jnp.dot(h1, w2, preferred_element_type=jnp.float32) + b2, 0.0)
        out = jnp.dot(h2, w3, preferred_element_type=jnp.float32) + b3
        o_ref[...] = out[:, :n_actions].astype(o_ref.dtype)

    return kernel


def dqn_cartpole_forward(x, packed, offs, input_dim, n_actions, *, tm=128):
    """x: (B, input_dim) f32 -> (B, n_actions) f32 Q-values."""
    B = x.shape[0]
    # Batch tile: 128 rows for real batches; small batches round up to 8 rows.
    TM = tm if B >= tm else _rup(max(B, 1), 8)
    B_pad = _rup(B, TM)
    if B_pad != B:
        x = jnp.pad(x, ((0, B_pad - B), (0, 0)))

    grid = (B_pad // TM,)
    kernel = _make_mlp_kernel(input_dim, n_actions, offs)

    H = HIDDEN
    flops = 2 * B_pad * (input_dim * H + H * H + H * H)
    bytes_accessed = (B_pad * input_dim + packed.size + B_pad * n_actions) * 4

    out = pl.pallas_call(
        kernel,
        out_shape=jax.ShapeDtypeStruct((B_pad, n_actions), jnp.float32),
        grid=grid,
        in_specs=[
            pl.BlockSpec((TM, input_dim), lambda i: (i, 0)),
            pl.BlockSpec(packed.shape, lambda i: (0, 0)),  # VMEM-resident weights
        ],
        out_specs=pl.BlockSpec((TM, n_actions), lambda i: (i, 0)),
        compiler_params=pltpu.CompilerParams(
            dimension_semantics=("parallel",)),
        cost_estimate=pl.CostEstimate(
            flops=flops, transcendentals=0, bytes_accessed=bytes_accessed),
    )(x, packed)

    return out[:B] if B_pad != B else out


# ---------------------------------------------------------------------------
# Init (mimics nn.Linear uniform(-1/sqrt(fan_in), 1/sqrt(fan_in))) + reference.
# ---------------------------------------------------------------------------
def init_params(key, input_dim, n_actions, hidden=HIDDEN):
    ks = jax.random.split(key, 6)

    def lin(kw, kb, fan_in, fan_out):
        bound = 1.0 / jnp.sqrt(jnp.float32(fan_in))
        w = jax.random.uniform(kw, (fan_in, fan_out), jnp.float32, -bound, bound)
        b = jax.random.uniform(kb, (1, fan_out), jnp.float32, -bound, bound)
        return w, b

    w1, b1 = lin(ks[0], ks[1], input_dim, hidden)
    w2, b2 = lin(ks[2], ks[3], hidden, hidden)
    w3, b3 = lin(ks[4], ks[5], hidden, n_actions)
    return {"w1": w1, "b1": b1, "w2": w2, "b2": b2, "w3": w3, "b3": b3}


def reference_forward(x, p):
    h1 = jnp.maximum(x @ p["w1"] + p["b1"], 0.0)
    h2 = jnp.maximum(h1 @ p["w2"] + p["b2"], 0.0)
    return h2 @ p["w3"] + p["b3"]


if __name__ == "__main__":
    key = jax.random.PRNGKey(0)
    k_param, k_x1, k_x2 = jax.random.split(key, 3)

    # CartPole: observation dim 4, 2 actions.
    input_dim = 4
    n_actions = 2

    params = init_params(k_param, input_dim, n_actions)
    packed, offs, in_dim, n_act = pack_params(params)

    fwd = functools.partial(
        dqn_cartpole_forward, packed=packed, offs=offs,
        input_dim=in_dim, n_actions=n_act)

    # Replay-batch sized input: exercises the 2-step batch grid (2 x 128-row tiles).
    x_big = jax.random.normal(k_x1, (256, input_dim), jnp.float32)
    out_big = jax.block_until_ready(fwd(x_big))
    ref_big = reference_forward(x_big, params)
    assert out_big.shape == (256, n_actions)
    assert jnp.allclose(out_big, ref_big, atol=1e-5, rtol=1e-5), "batch-256 mismatch"

    # Small / ragged acting-path batch: exercises batch padding + slice-back.
    x_small = jax.random.normal(k_x2, (5, input_dim), jnp.float32)
    out_small = jax.block_until_ready(fwd(x_small))
    ref_small = reference_forward(x_small, params)
    assert out_small.shape == (5, n_actions)
    assert jnp.allclose(out_small, ref_small, atol=1e-5, rtol=1e-5), "batch-5 mismatch"

    print("KERNEL_OK")
</pallas_src>

<mosaic_0001>
module attributes {stable_mosaic.version = 11 : i64} {
  func.func @kernel(%arg0: i32, %arg1: memref<128x4xf32, #tpu.memory_space<vmem>>, %arg2: memref<152x64xf32, #tpu.memory_space<vmem>>, %arg3: memref<128x2xf32, #tpu.memory_space<vmem>>) attributes {dimension_semantics = [#tpu.dimension_semantics<parallel>], iteration_bounds = array<i64: 2>, scalar_prefetch = 0 : i64, scratch_operands = 0 : i64, tpu.core_type = #tpu.core_type<tc>, window_params = [{transform_indices = @transform_0, window_bounds = array<i64: 128, 4>}, {pipeline_mode = #tpu.pipeline_mode<synchronous>, transform_indices = @transform_1, window_bounds = array<i64: 152, 64>}, {transform_indices = @transform_2, window_bounds = array<i64: 128, 2>}]} {
    %c0 = arith.constant 0 : index
    %c0_0 = arith.constant 0 : index
    %0 = vector.load %arg1[%c0, %c0_0] : memref<128x4xf32, #tpu.memory_space<vmem>>, vector<128x4xf32>
    %c0_1 = arith.constant 0 : index
    %c0_2 = arith.constant 0 : index
    %1 = vector.load %arg2[%c0_1, %c0_2] : memref<152x64xf32, #tpu.memory_space<vmem>>, vector<4x64xf32>
    %c4 = arith.constant 4 : index
    %c0_3 = arith.constant 0 : index
    %2 = vector.load %arg2[%c4, %c0_3] : memref<152x64xf32, #tpu.memory_space<vmem>>, vector<1x64xf32>
    %c8 = arith.constant 8 : index
    %c0_4 = arith.constant 0 : index
    %3 = vector.load %arg2[%c8, %c0_4] : memref<152x64xf32, #tpu.memory_space<vmem>>, vector<64x64xf32>
    %c72 = arith.constant 72 : index
    %c0_5 = arith.constant 0 : index
    %4 = vector.load %arg2[%c72, %c0_5] : memref<152x64xf32, #tpu.memory_space<vmem>>, vector<1x64xf32>
    %c80 = arith.constant 80 : index
    %c0_6 = arith.constant 0 : index
    %5 = vector.load %arg2[%c80, %c0_6] : memref<152x64xf32, #tpu.memory_space<vmem>>, vector<64x64xf32>
    %c144 = arith.constant 144 : index
    %c0_7 = arith.constant 0 : index
    %6 = vector.load %arg2[%c144, %c0_7] : memref<152x64xf32, #tpu.memory_space<vmem>>, vector<1x64xf32>
    %cst = arith.constant dense<0.000000e+00> : vector<128x64xf32>
    %7 = tpu.matmul %0, %1, %cst {dimension_numbers = #tpu.dot_dimension_numbers<[1], [0], [0], [1], [0, 0, 1, 1], [], []>} : vector<128x4xf32>, vector<4x64xf32>, vector<128x64xf32> -> vector<128x64xf32>
    %8 = vector.broadcast %2 : vector<1x64xf32> to vector<128x64xf32>
    %9 = arith.addf %7, %8 : vector<128x64xf32>
    %cst_8 = arith.constant 0.000000e+00 : f32
    %10 = vector.broadcast %cst_8 : f32 to vector<128x64xf32>
    %11 = arith.maximumf %9, %10 : vector<128x64xf32>
    %cst_9 = arith.constant dense<0.000000e+00> : vector<128x64xf32>
    %12 = tpu.matmul %11, %3, %cst_9 {dimension_numbers = #tpu.dot_dimension_numbers<[1], [0], [0], [1], [0, 0, 1, 1], [], []>} : vector<128x64xf32>, vector<64x64xf32>, vector<128x64xf32> -> vector<128x64xf32>
    %13 = vector.broadcast %4 : vector<1x64xf32> to vector<128x64xf32>
    %14 = arith.addf %12, %13 : vector<128x64xf32>
    %cst_10 = arith.constant 0.000000e+00 : f32
    %15 = vector.broadcast %cst_10 : f32 to vector<128x64xf32>
    %16 = arith.maximumf %14, %15 : vector<128x64xf32>
    %cst_11 = arith.constant dense<0.000000e+00> : vector<128x64xf32>
    %17 = tpu.matmul %16, %5, %cst_11 {dimension_numbers = #tpu.dot_dimension_numbers<[1], [0], [0], [1], [0, 0, 1, 1], [], []>} : vector<128x64xf32>, vector<64x64xf32>, vector<128x64xf32> -> vector<128x64xf32>
    %18 = vector.broadcast %6 : vector<1x64xf32> to vector<128x64xf32>
    %19 = arith.addf %17, %18 : vector<128x64xf32>
    %20 = vector.extract_strided_slice %19 {offsets = [0, 0], sizes = [128, 2], strides = [1, 1]} : vector<128x64xf32> to vector<128x2xf32>
    %c0_12 = arith.constant 0 : index
    %c0_13 = arith.constant 0 : index
    %21 = vector.load %arg3[%c0_12, %c0_13] : memref<128x2xf32, #tpu.memory_space<vmem>>, vector<128x2xf32>
    tpu.vector_store %arg3[%c0_12, %c0_13], %20 {strides = array<i32>} : memref<128x2xf32, #tpu.memory_space<vmem>>, vector<128x2xf32>,
    return
  }
  func.func @transform_0(%arg0: i32) -> (i32, i32) {
    %c0_i32 = arith.constant 0 : i32
    %c0_i32_0 = arith.constant 0 : i32
    return %arg0, %c0_i32 : i32, i32
  }
  func.func @transform_1(%arg0: i32) -> (i32, i32) {
    %c0_i32 = arith.constant 0 : i32
    %c0_i32_0 = arith.constant 0 : i32
    %c0_i32_1 = arith.constant 0 : i32
    return %c0_i32, %c0_i32_0 : i32, i32
  }
  func.func @transform_2(%arg0: i32) -> (i32, i32) {
    %c0_i32 = arith.constant 0 : i32
    %c0_i32_0 = arith.constant 0 : i32
    return %arg0, %c0_i32 : i32, i32
  }
}

</mosaic_0001>

<llo_original>
// kernel: tpu_custom_call.1
$region0: #{tpu_custom_call.1}
  #allocation0 [shape = 'u32[]', space=smem, size = 0x4, offset = 0x4, fixed_abs, tag = 'smem constant byte address 0x4 - core index']
  #allocation1 [shape = 'u32[72,128]{1,0:T(1,128)}', space=vmem, size = 0x9000, scoped, tag = 'internal scratch']
  %s0 = inlined_call_operand.vmem [shape: f32[256,4], index: 0, kind: input, shape index: {}]
  %s1 = inlined_call_operand.vmem [shape: f32[152,64], index: 1, kind: input, shape index: {}]
  %s2 = inlined_call_operand.vmem [shape: f32[256,2], index: 2, kind: output, shape index: {}]
  %s3 = sld [smem:[#allocation0]]
  $region41: #{tpu_custom_call.1} parent=0
    _
  %s5 = ssub.s32 1, %s3
  %s6 = scalar_select 0, %s5, %s3
  loop: start=0, step=1, limit=4
  $region2: #{tpu_custom_call.1} parent=0 // loop_pre_header
    _
  $region3: #{tpu_custom_call.1} parent=0 // loop_header
    %s8 = sphi 0, %s12
    %p9 = scmp.ge.s32.totalorder %s8, 4
    %s18 = sphi 0, %s20
    %s21 = sphi 0, %s18
    %s22 = sphi 0, %s21
    %s38 = sphi 0, %s22
    %s42 = sphi 0, %s42
    %s44 = sphi 0, %s42
    %s45 = sphi 0, %s44
    %s59 = sphi 0, %s45
    %s65 = sphi 0, %s67
    %s68 = sphi 0, %s65
    %s69 = sphi 0, %s68
    %s85 = sphi 0, %s69
  $region4: #{tpu_custom_call.1} parent=0 // loop_header_branch
    %11 = sbr.rel (%p9) target = $region8
  $region5: #{tpu_custom_call.1} parent=0 // loop_body
    %s13 = ssub.s32 %s8, 1
    %s14 = ssub.s32 %s8, 2
    %s15 = sadd.s32 %s8, 1
    %s16 = ssub.s32 %s8, %s15
    %p17 = scmp.eq.s32.totalorder %s16, 0
    %s19 = sadd.s32 %s18, 1
    %s20 = scalar_select %p17, %s18, %s19
    %p23 = pneg %p17
    %p24 = scmp.eq.s32.totalorder %s8, 1
    %p25 = por %p23, %p24
    %p26 = scmp.ne.s32.totalorder %s18, %s21
    %p27 = scmp.eq.s32.totalorder %s8, 0
    %p28 = por %p26, %p27
    %p29 = scmp.ne.s32.totalorder %s18, %s21
    %p30 = scmp.eq.s32.totalorder %s13, 1
    %p31 = por %p29, %p30
    %p32 = scmp.ne.s32.totalorder %s21, %s22
    %p33 = scmp.eq.s32.totalorder %s13, 0
    %p34 = por %p32, %p33
    %p35 = scmp.ne.s32.totalorder %s21, %s22
    %p36 = scmp.eq.s32.totalorder %s14, 1
    %p37 = por %p35, %p36
    %p39 = scmp.ne.s32.totalorder %s22, %s38
    %p40 = scmp.eq.s32.totalorder %s14, 0
    %p41 = por %p39, %p40
    %s43 = sadd.s32 %s42, 1
    %p46 = scmp.eq.s32.totalorder %s8, 1
    %p47 = scmp.ne.s32.totalorder %s42, %s44
    %p48 = scmp.eq.s32.totalorder %s8, 0
    %p49 = por %p47, %p48
    %p50 = scmp.ne.s32.totalorder %s42, %s44
    %p51 = scmp.eq.s32.totalorder %s13, 1
    %p52 = por %p50, %p51
    %p53 = scmp.ne.s32.totalorder %s44, %s45
    %p54 = scmp.eq.s32.totalorder %s13, 0
    %p55 = por %p53, %p54
    %p56 = scmp.ne.s32.totalorder %s44, %s45
    %p57 = scmp.eq.s32.totalorder %s14, 1
    %p58 = por %p56, %p57
    %p60 = scmp.ne.s32.totalorder %s45, %s59
    %p61 = scmp.eq.s32.totalorder %s14, 0
    %p62 = por %p60, %p61
    %s63 = ssub.s32 %s8, %s15
    %p64 = scmp.eq.s32.totalorder %s63, 0
    %s66 = sadd.s32 %s65, 1
    %s67 = scalar_select %p64, %s65, %s66
    %p70 = pneg %p64
    %p71 = scmp.eq.s32.totalorder %s8, 1
    %p72 = por %p70, %p71
    %p73 = scmp.ne.s32.totalorder %s65, %s68
    %p74 = scmp.eq.s32.totalorder %s8, 0
    %p75 = por %p73, %p74
    %p76 = scmp.ne.s32.totalorder %s65, %s68
    %p77 = scmp.eq.s32.totalorder %s13, 1
    %p78 = por %p76, %p77
    %p79 = scmp.ne.s32.totalorder %s68, %s69
    %p80 = scmp.eq.s32.totalorder %s13, 0
    %p81 = por %p79, %p80
    %p82 = scmp.ne.s32.totalorder %s68, %s69
    %p83 = scmp.eq.s32.totalorder %s14, 1
    %p84 = por %p82, %p83
    %p86 = scmp.ne.s32.totalorder %s69, %s85
    %p87 = scmp.eq.s32.totalorder %s14, 0
    %p88 = por %p86, %p87
    %p89 = scmp.le.s32.totalorder 1, %s8
    %p90 = scmp.lt.s32.totalorder %s8, 3
    %p91 = pnand %p89, %p90
    %p92 = pneg %p91
    // Predicated region
    $region9: #{tpu_custom_call.1} parent=5 // pred_check
      _
    $region10: #{tpu_custom_call.1} parent=5 // pred_check_branch
      %94 = sbr.rel (%p91) target = $region12
    $region11: #{tpu_custom_call.1} parent=5 // pred_region
      %s95 = ssub.s32 %s8, 1
      // Predicated region
      $region13: #{tpu_custom_call.1} parent=11 // pred_check
        %p96 = pneg %p55
      $region14: #{tpu_custom_call.1} parent=11 // pred_check_branch
        %98 = sbr.rel (%p96) target = $region16
      $region15: #{tpu_custom_call.1} parent=11 // pred_region
        _
      $region16: #{tpu_custom_call.1} parent=11 // pred_fallthru
        _
    $region12: #{tpu_custom_call.1} parent=5 // pred_fallthru
      _
    %p99 = scmp.lt.s32.totalorder %s8, 2
    // Predicated region
    $region17: #{tpu_custom_call.1} parent=5 // pred_check
      %p100 = pneg %p99
    $region18: #{tpu_custom_call.1} parent=5 // pred_check_branch
      %102 = sbr.rel (%p100) target = $region20
    $region19: #{tpu_custom_call.1} parent=5 // pred_region
      // Predicated region
      $region21: #{tpu_custom_call.1} parent=19 // pred_check
        %p103 = pneg %p28
      $region22: #{tpu_custom_call.1} parent=19 // pred_check_branch
        %105 = sbr.rel (%p103) target = $region24
      $region23: #{tpu_custom_call.1} parent=19 // pred_region
        %s106 = smul.u32 16, %s8
        %p107 = scmp.lt.s32.totalorder %s106, 31
        %s108 = scalar_select %p107, %s106, 31
        %s109 = smul.addr %s108, 8
        %s110 = scalar_lea.vmem %s0, %s109
        %s111 = smul.u32 16, %s8
      $region24: #{tpu_custom_call.1} parent=19 // pred_fallthru
        _
    $region20: #{tpu_custom_call.1} parent=5 // pred_fallthru
      _
    %p112 = scmp.le.s32.totalorder 1, %s8
    %p113 = scmp.lt.s32.totalorder %s8, 3
    %p114 = pnand %p112, %p113
    %p115 = pneg %p114
    // Predicated region
    $region25: #{tpu_custom_call.1} parent=5 // pred_check
      _
    $region26: #{tpu_custom_call.1} parent=5 // pred_check_branch
      %117 = sbr.rel (%p114) target = $region28
    $region27: #{tpu_custom_call.1} parent=5 // pred_region
      %s118 = ssub.s32 %s8, 1
      %s119 = smul.u32 16, %s13
      %p120 = scmp.lt.s32.totalorder %s119, 31
      %s121 = scalar_select %p120, %s119, 31
      %s122 = smul.addr %s121, 8
      %s123 = scalar_lea.vmem %s0, %s122
      %p124 = pneg %p34
      %p125 = pneg %p31
      %p126 = pneg %p55
      %p127 = pneg %p52
      %p128 = pneg %p81
      %p129 = pneg %p78
      %s130 = smul.u32 16, %s13
      %p131 = scmp.lt.s32.totalorder %s130, 31
      %s132 = scalar_select %p131, %s130, 31
      %s133 = smul.addr %s132, 8
      %s134 = scalar_lea.vmem %s2, %s133
      %s135 = smul.u32 16, %s13
      %p136 = scmp.lt.s32.totalorder %s135, 31
      %s137 = scalar_select %p136, %s135, 31
      %s138 = smul.addr %s137, 8
      %s139 = scalar_lea.vmem %s0, %s138
      %s140 = smul.u32 16, %s13
      %s141 = smul.u32 16, %s13
      %p142 = scmp.lt.s32.totalorder %s141, 31
      %s143 = scalar_select %p142, %s141, 31
      %s144 = smul.addr %s143, 8
      %s145 = scalar_lea.vmem %s2, %s144
      %s146 = smul.u32 16, %s13
      %v147 = vld [vmem:[%s139] sm:$0xff]
      %v148 = vld [vmem:[%s139 + $0x8] sm:$0xff]
      %v149 = vld [vmem:[%s139 + $0x10] sm:$0xff]
      %v150 = vld [vmem:[%s139 + $0x18] sm:$0xff]
      %v151 = vld [vmem:[%s139 + $0x20] sm:$0xff]
      %v152 = vld [vmem:[%s139 + $0x28] sm:$0xff]
      %v153 = vld [vmem:[%s139 + $0x30] sm:$0xff]
      %v154 = vld [vmem:[%s139 + $0x38] sm:$0xff]
      %v155 = vld [vmem:[%s139 + $0x40] sm:$0xff]
      %v156 = vld [vmem:[%s139 + $0x48] sm:$0xff]
      %v157 = vld [vmem:[%s139 + $0x50] sm:$0xff]
      %v158 = vld [vmem:[%s139 + $0x58] sm:$0xff]
      %v159 = vld [vmem:[%s139 + $0x60] sm:$0xff]
      %v160 = vld [vmem:[%s139 + $0x68] sm:$0xff]
      %v161 = vld [vmem:[%s139 + $0x70] sm:$0xff]
      %v162 = vld [vmem:[%s139 + $0x78] sm:$0xff]
      %v163 = vld [vmem:[%s1] sm:$0xf]
      %v164 = vld [vmem:[%s1 + $0x4] sm:$0x1]
      %v165 = vld [vmem:[%s1 + $0x8] sm:$0xff]
      %v166 = vld [vmem:[%s1 + $0x10] sm:$0xff]
      %v167 = vld [vmem:[%s1 + $0x18] sm:$0xff]
      %v168 = vld [vmem:[%s1 + $0x20] sm:$0xff]
      %v169 = vld [vmem:[%s1 + $0x28] sm:$0xff]
      %v170 = vld [vmem:[%s1 + $0x30] sm:$0xff]
      %v171 = vld [vmem:[%s1 + $0x38] sm:$0xff]
      %v172 = vld [vmem:[%s1 + $0x40] sm:$0xff]
      %v173 = vld [vmem:[%s1 + $0x48] sm:$0x1]
      %v174 = vld [vmem:[%s1 + $0x50] sm:$0xff]
      %v175 = vld [vmem:[%s1 + $0x58] sm:$0xff]
      %v176 = vld [vmem:[%s1 + $0x60] sm:$0xff]
      %v177 = vld [vmem:[%s1 + $0x68] sm:$0xff]
      %v178 = vld [vmem:[%s1 + $0x70] sm:$0xff]
      %v179 = vld [vmem:[%s1 + $0x78] sm:$0xff]
      %v180 = vld [vmem:[%s1 + $0x80] sm:$0xff]
      %v181 = vld [vmem:[%s1 + $0x88] sm:$0xff]
      %v182 = vld [vmem:[%s1 + $0x90] sm:$0x1]
      %v183 = vperm.slane %v164, 0
      %vm184 = vcmask 31744
      %v186 = vsel %vm184, %v147, 0
      %v189 = vsel %vm184, %v148, 0
      %v192 = vsel %vm184, %v149, 0
      %v195 = vsel %vm184, %v150, 0
      %v198 = vsel %vm184, %v151, 0
      %v201 = vsel %vm184, %v152, 0
      %v204 = vsel %vm184, %v153, 0
      %v207 = vsel %vm184, %v154, 0
      %v210 = vsel %vm184, %v155, 0
      %v213 = vsel %vm184, %v156, 0
      %v216 = vsel %vm184, %v157, 0
      %v219 = vsel %vm184, %v158, 0
      %v222 = vsel %vm184, %v159, 0
      %v225 = vsel %vm184, %v160, 0
      %v228 = vsel %vm184, %v161, 0
      %v231 = vsel %vm184, %v162, 0
      %vm233 = vcmask 1043456
      %v235 = vsel %vm233, %v163, 0
      %237 = vmatpush.msra.mxu0 0.0
      %238 = vmatpush.msra.mxu0 0.0
      %239 = vmatpush.msra.mxu0 0.0
      %240 = vmatpush.msra.mxu0 0.0
      %241 = vmatpush.msra.mxu0 0.0
      %242 = vmatpush.msra.mxu0 0.0
      %243 = vmatpush.msra.mxu0 0.0
      %244 = vmatpush.msra.mxu0 0.0
      %245 = vmatpush.msra.mxu0 0.0
      %246 = vmatpush.msra.mxu0 0.0
      %247 = vmatpush.msra.mxu0 0.0
      %248 = vmatpush.msra.mxu0 0.0
      %249 = vmatpush.msra.mxu0 0.0
      %250 = vmatpush.msra.mxu0 0.0
      %251 = vmatpush.msra.mxu0 0.0
      %252 = vmatpush.msra.mxu0 %v235
      %253 = vmatmul.f32.gmra.mxu0 %v186
      %v254 = vpop.f32.mrf.mxu0
      %v255 = vadd.f32 %v183, %v254
      %256 = vmatmul.f32.gmra.mxu0 %v189
      %v257 = vpop.f32.mrf.mxu0
      %v258 = vadd.f32 %v183, %v257
      %259 = vmatmul.f32.gmra.mxu0 %v192
      %v260 = vpop.f32.mrf.mxu0
      %v261 = vadd.f32 %v183, %v260
      %262 = vmatmul.f32.gmra.mxu0 %v195
      %v263 = vpop.f32.mrf.mxu0
      %v264 = vadd.f32 %v183, %v263
      %265 = vmatmul.f32.gmra.mxu0 %v198
      %v266 = vpop.f32.mrf.mxu0
      %v267 = vadd.f32 %v183, %v266
      %268 = vmatmul.f32.gmra.mxu0 %v201
      %v269 = vpop.f32.mrf.mxu0
      %v270 = vadd.f32 %v183, %v269
      %271 = vmatmul.f32.gmra.mxu0 %v204
      %v272 = vpop.f32.mrf.mxu0
      %v273 = vadd.f32 %v183, %v272
      %274 = vmatmul.f32.gmra.mxu0 %v207
      %v275 = vpop.f32.mrf.mxu0
      %v276 = vadd.f32 %v183, %v275
      %277 = vmatmul.f32.gmra.mxu0 %v210
      %v278 = vpop.f32.mrf.mxu0
      %v279 = vadd.f32 %v183, %v278
      %280 = vmatmul.f32.gmra.mxu0 %v213
      %v281 = vpop.f32.mrf.mxu0
      %v282 = vadd.f32 %v183, %v281
      %283 = vmatmul.f32.gmra.mxu0 %v216
      %v284 = vpop.f32.mrf.mxu0
      %v285 = vadd.f32 %v183, %v284
      %286 = vmatmul.f32.gmra.mxu0 %v219
      %v287 = vpop.f32.mrf.mxu0
      %v288 = vadd.f32 %v183, %v287
      %289 = vmatmul.f32.gmra.mxu0 %v222
      %v290 = vpop.f32.mrf.mxu0
      %v291 = vadd.f32 %v183, %v290
      %292 = vmatmul.f32.gmra.mxu0 %v225
      %v293 = vpop.f32.mrf.mxu0
      %v294 = vadd.f32 %v183, %v293
      %295 = vmatmul.f32.gmra.mxu0 %v228
      %v296 = vpop.f32.mrf.mxu0
      %v297 = vadd.f32 %v183, %v296
      %298 = vmatmul.f32.gmra.mxu0 %v231
      %v299 = vpop.f32.mrf.mxu0
      %v300 = vadd.f32 %v183, %v299
      %301 = vdwg.mxu0
      %v302 = vmax.f32 %v255, 0.0
      %v303 = vmax.f32 %v258, 0.0
      %v304 = vmax.f32 %v261, 0.0
      %v305 = vmax.f32 %v264, 0.0
      %v306 = vmax.f32 %v267, 0.0
      %v307 = vmax.f32 %v270, 0.0
      %v308 = vmax.f32 %v273, 0.0
      %v309 = vmax.f32 %v276, 0.0
      %v310 = vmax.f32 %v279, 0.0
      %v311 = vmax.f32 %v282, 0.0
      %v312 = vmax.f32 %v285, 0.0
      %v313 = vmax.f32 %v288, 0.0
      %v314 = vmax.f32 %v291, 0.0
      %v315 = vmax.f32 %v294, 0.0
      %v316 = vmax.f32 %v297, 0.0
      %v317 = vmax.f32 %v300, 0.0
      %v318 = vperm.slane %v173, 0
      %vm319 = vcmask 523264
      %v321 = vsel %vm319, %v302, 0
      %v324 = vsel %vm319, %v303, 0
      %v327 = vsel %vm319, %v304, 0
      %v330 = vsel %vm319, %v305, 0
      %v333 = vsel %vm319, %v306, 0
      %v336 = vsel %vm319, %v307, 0
      %v339 = vsel %vm319, %v308, 0
      %v342 = vsel %vm319, %v309, 0
      %v345 = vsel %vm319, %v310, 0
      %v348 = vsel %vm319, %v311, 0
      %v351 = vsel %vm319, %v312, 0
      %v354 = vsel %vm319, %v313, 0
      %v357 = vsel %vm319, %v314, 0
      %v360 = vsel %vm319, %v315, 0
      %v363 = vsel %vm319, %v316, 0
      %v366 = vsel %vm319, %v317, 0
      %368 = vmatpush.msra.mxu0 0.0
      %369 = vmatpush.msra.mxu0 0.0
      %370 = vmatpush.msra.mxu0 0.0
      %371 = vmatpush.msra.mxu0 0.0
      %372 = vmatpush.msra.mxu0 0.0
      %373 = vmatpush.msra.mxu0 0.0
      %374 = vmatpush.msra.mxu0 0.0
      %375 = vmatpush.msra.mxu0 0.0
      %376 = vmatpush.msra.mxu0 %v172
      %377 = vmatpush.msra.mxu0 %v171
      %378 = vmatpush.msra.mxu0 %v170
      %379 = vmatpush.msra.mxu0 %v169
      %380 = vmatpush.msra.mxu0 %v168
      %381 = vmatpush.msra.mxu0 %v167
      %382 = vmatpush.msra.mxu0 %v166
      %383 = vmatpush.msra.mxu0 %v165
      %384 = vmatmul.f32.gmra.mxu0 %v321
      %v385 = vpop.f32.mrf.mxu0
      %v386 = vadd.f32 %v318, %v385
      %387 = vmatmul.f32.gmra.mxu0 %v324
      %v388 = vpop.f32.mrf.mxu0
      %v389 = vadd.f32 %v318, %v388
      %390 = vmatmul.f32.gmra.mxu0 %v327
      %v391 = vpop.f32.mrf.mxu0
      %v392 = vadd.f32 %v318, %v391
      %393 = vmatmul.f32.gmra.mxu0 %v330
      %v394 = vpop.f32.mrf.mxu0
      %v395 = vadd.f32 %v318, %v394
      %396 = vmatmul.f32.gmra.mxu0 %v333
      %v397 = vpop.f32.mrf.mxu0
      %v398 = vadd.f32 %v318, %v397
      %399 = vmatmul.f32.gmra.mxu0 %v336
      %v400 = vpop.f32.mrf.mxu0
      %v401 = vadd.f32 %v318, %v400
      %402 = vmatmul.f32.gmra.mxu0 %v339
      %v403 = vpop.f32.mrf.mxu0
      %v404 = vadd.f32 %v318, %v403
      %405 = vmatmul.f32.gmra.mxu0 %v342
      %v406 = vpop.f32.mrf.mxu0
      %v407 = vadd.f32 %v318, %v406
      %408 = vmatmul.f32.gmra.mxu0 %v345
      %v409 = vpop.f32.mrf.mxu0
      %v410 = vadd.f32 %v318, %v409
      %411 = vmatmul.f32.gmra.mxu0 %v348
      %v412 = vpop.f32.mrf.mxu0
      %v413 = vadd.f32 %v318, %v412
      %414 = vmatmul.f32.gmra.mxu0 %v351
      %v415 = vpop.f32.mrf.mxu0
      %v416 = vadd.f32 %v318, %v415
      %417 = vmatmul.f32.gmra.mxu0 %v354
      %v418 = vpop.f32.mrf.mxu0
      %v419 = vadd.f32 %v318, %v418
      %420 = vmatmul.f32.gmra.mxu0 %v357
      %v421 = vpop.f32.mrf.mxu0
      %v422 = vadd.f32 %v318, %v421
      %423 = vmatmul.f32.gmra.mxu0 %v360
      %v424 = vpop.f32.mrf.mxu0
      %v425 = vadd.f32 %v318, %v424
      %426 = vmatmul.f32.gmra.mxu0 %v363
      %v427 = vpop.f32.mrf.mxu0
      %v428 = vadd.f32 %v318, %v427
      %429 = vmatmul.f32.gmra.mxu0 %v366
      %v430 = vpop.f32.mrf.mxu0
      %v431 = vadd.f32 %v318, %v430
      %432 = vdwg.mxu0
      %v433 = vmax.f32 %v386, 0.0
      %v434 = vmax.f32 %v389, 0.0
      %v435 = vmax.f32 %v392, 0.0
      %v436 = vmax.f32 %v395, 0.0
      %v437 = vmax.f32 %v398, 0.0
      %v438 = vmax.f32 %v401, 0.0
      %v439 = vmax.f32 %v404, 0.0
      %v440 = vmax.f32 %v407, 0.0
      %v441 = vmax.f32 %v410, 0.0
      %v442 = vmax.f32 %v413, 0.0
      %v443 = vmax.f32 %v416, 0.0
      %v444 = vmax.f32 %v419, 0.0
      %v445 = vmax.f32 %v422, 0.0
      %v446 = vmax.f32 %v425, 0.0
      %v447 = vmax.f32 %v428, 0.0
      %v448 = vmax.f32 %v431, 0.0
      %v449 = vperm.slane %v182, 0
      %v451 = vsel %vm319, %v433, 0
      %v454 = vsel %vm319, %v434, 0
      %v457 = vsel %vm319, %v435, 0
      %v460 = vsel %vm319, %v436, 0
      %v463 = vsel %vm319, %v437, 0
      %v466 = vsel %vm319, %v438, 0
      %v469 = vsel %vm319, %v439, 0
      %v472 = vsel %vm319, %v440, 0
      %v475 = vsel %vm319, %v441, 0
      %v478 = vsel %vm319, %v442, 0
      %v481 = vsel %vm319, %v443, 0
      %v484 = vsel %vm319, %v444, 0
      %v487 = vsel %vm319, %v445, 0
      %v490 = vsel %vm319, %v446, 0
      %v493 = vsel %vm319, %v447, 0
      %v496 = vsel %vm319, %v448, 0
      %498 = vmatpush.msra.mxu0 0.0
      %499 = vmatpush.msra.mxu0 0.0
      %500 = vmatpush.msra.mxu0 0.0
      %501 = vmatpush.msra.mxu0 0.0
      %502 = vmatpush.msra.mxu0 0.0
      %503 = vmatpush.msra.mxu0 0.0
      %504 = vmatpush.msra.mxu0 0.0
      %505 = vmatpush.msra.mxu0 0.0
      %506 = vmatpush.msra.mxu0 %v181
      %507 = vmatpush.msra.mxu0 %v180
      %508 = vmatpush.msra.mxu0 %v179
      %509 = vmatpush.msra.mxu0 %v178
      %510 = vmatpush.msra.mxu0 %v177
      %511 = vmatpush.msra.mxu0 %v176
      %512 = vmatpush.msra.mxu0 %v175
      %513 = vmatpush.msra.mxu0 %v174
      %514 = vmatmul.f32.gmra.mxu0 %v451
      %v515 = vpop.f32.mrf.mxu0
      %v516 = vadd.f32 %v449, %v515
      %517 = vmatmul.f32.gmra.mxu0 %v454
      %v518 = vpop.f32.mrf.mxu0
      %v519 = vadd.f32 %v449, %v518
      %520 = vmatmul.f32.gmra.mxu0 %v457
      %v521 = vpop.f32.mrf.mxu0
      %v522 = vadd.f32 %v449, %v521
      %523 = vmatmul.f32.gmra.mxu0 %v460
      %v524 = vpop.f32.mrf.mxu0
      %v525 = vadd.f32 %v449, %v524
      %526 = vmatmul.f32.gmra.mxu0 %v463
      %v527 = vpop.f32.mrf.mxu0
      %v528 = vadd.f32 %v449, %v527
      %529 = vmatmul.f32.gmra.mxu0 %v466
      %v530 = vpop.f32.mrf.mxu0
      %v531 = vadd.f32 %v449, %v530
      %532 = vmatmul.f32.gmra.mxu0 %v469
      %v533 = vpop.f32.mrf.mxu0
      %v534 = vadd.f32 %v449, %v533
      %535 = vmatmul.f32.gmra.mxu0 %v472
      %v536 = vpop.f32.mrf.mxu0
      %v537 = vadd.f32 %v449, %v536
      %538 = vmatmul.f32.gmra.mxu0 %v475
      %v539 = vpop.f32.mrf.mxu0
      %v540 = vadd.f32 %v449, %v539
      %541 = vmatmul.f32.gmra.mxu0 %v478
      %v542 = vpop.f32.mrf.mxu0
      %v543 = vadd.f32 %v449, %v542
      %544 = vmatmul.f32.gmra.mxu0 %v481
      %v545 = vpop.f32.mrf.mxu0
      %v546 = vadd.f32 %v449, %v545
      %547 = vmatmul.f32.gmra.mxu0 %v484
      %v548 = vpop.f32.mrf.mxu0
      %v549 = vadd.f32 %v449, %v548
      %550 = vmatmul.f32.gmra.mxu0 %v487
      %v551 = vpop.f32.mrf.mxu0
      %v552 = vadd.f32 %v449, %v551
      %553 = vmatmul.f32.gmra.mxu0 %v490
      %v554 = vpop.f32.mrf.mxu0
      %v555 = vadd.f32 %v449, %v554
      %556 = vmatmul.f32.gmra.mxu0 %v493
      %v557 = vpop.f32.mrf.mxu0
      %v558 = vadd.f32 %v449, %v557
      %559 = vmatmul.f32.gmra.mxu0 %v496
      %v560 = vpop.f32.mrf.mxu0
      %v561 = vadd.f32 %v449, %v560
      %562 = vdwg.mxu0
      %vm563 = vcmask 15360
      %564 = vst.msk [vmem:[%s145] sm:$0xff] %vm563, %v516
      %565 = vst.msk [vmem:[%s145 + $0x8] sm:$0xff] %vm563, %v519
      %566 = vst.msk [vmem:[%s145 + $0x10] sm:$0xff] %vm563, %v522
      %567 = vst.msk [vmem:[%s145 + $0x18] sm:$0xff] %vm563, %v525
      %568 = vst.msk [vmem:[%s145 + $0x20] sm:$0xff] %vm563, %v528
      %569 = vst.msk [vmem:[%s145 + $0x28] sm:$0xff] %vm563, %v531
      %570 = vst.msk [vmem:[%s145 + $0x30] sm:$0xff] %vm563, %v534
      %571 = vst.msk [vmem:[%s145 + $0x38] sm:$0xff] %vm563, %v537
      %572 = vst.msk [vmem:[%s145 + $0x40] sm:$0xff] %vm563, %v540
      %573 = vst.msk [vmem:[%s145 + $0x48] sm:$0xff] %vm563, %v543
      %574 = vst.msk [vmem:[%s145 + $0x50] sm:$0xff] %vm563, %v546
      %575 = vst.msk [vmem:[%s145 + $0x58] sm:$0xff] %vm563, %v549
      %576 = vst.msk [vmem:[%s145 + $0x60] sm:$0xff] %vm563, %v552
      %577 = vst.msk [vmem:[%s145 + $0x68] sm:$0xff] %vm563, %v555
      %578 = vst.msk [vmem:[%s145 + $0x70] sm:$0xff] %vm563, %v558
      %579 = vst.msk [vmem:[%s145 + $0x78] sm:$0xff] %vm563, %v561
      %s580 = smul.u32 16, %s13
      %p581 = scmp.lt.s32.totalorder %s580, 31
      %s582 = scalar_select %p581, %s580, 31
      %s583 = smul.addr %s582, 8
      %s584 = scalar_lea.vmem %s2, %s583
      // Predicated region
      $region29: #{tpu_custom_call.1} parent=27 // pred_check
        %p585 = pneg %p78
      $region30: #{tpu_custom_call.1} parent=27 // pred_check_branch
        %587 = sbr.rel (%p585) target = $region32
      $region31: #{tpu_custom_call.1} parent=27 // pred_region
        %s588 = smul.u32 16, %s13
      $region32: #{tpu_custom_call.1} parent=27 // pred_fallthru
        _
    $region28: #{tpu_custom_call.1} parent=5 // pred_fallthru
      _
    %p589 = scmp.le.s32.totalorder 2, %s8
    // Predicated region
    $region33: #{tpu_custom_call.1} parent=5 // pred_check
      %p590 = pneg %p589
    $region34: #{tpu_custom_call.1} parent=5 // pred_check_branch
      %592 = sbr.rel (%p590) target = $region36
    $region35: #{tpu_custom_call.1} parent=5 // pred_region
      %s593 = ssub.s32 %s8, 2
      // Predicated region
      $region37: #{tpu_custom_call.1} parent=35 // pred_check
        %p594 = pneg %p84
      $region38: #{tpu_custom_call.1} parent=35 // pred_check_branch
        %596 = sbr.rel (%p594) target = $region40
      $region39: #{tpu_custom_call.1} parent=35 // pred_region
        %s597 = smul.u32 16, %s14
        %p598 = scmp.lt.s32.totalorder %s597, 31
        %s599 = scalar_select %p598, %s597, 31
        %s600 = smul.addr %s599, 8
        %s601 = scalar_lea.vmem %s2, %s600
      $region40: #{tpu_custom_call.1} parent=35 // pred_fallthru
        _
    $region36: #{tpu_custom_call.1} parent=5 // pred_fallthru
      _
  $region6: #{tpu_custom_call.1} parent=0 // loop_footer
    %s12 = sadd.s32 1, %s8
  $region7: #{tpu_custom_call.1} parent=0 // loop_footer_branch
    %7 = sbr.rel target = $region3
  $region8: #{tpu_custom_call.1} parent=0 // loop_exit
    _

</llo_original>
